<compile_context>
chip_gen: v6e
topology: v6e:2x2x1
jax: 0.10.0
libtpu: 0.0.40
codegen_flags: <defaults>
</compile_context>

<pallas_src>
import jax
import jax.numpy as jnp
from jax.experimental import pallas as pl
from jax.experimental.pallas import tpu as pltpu


_VMEM_BUDGET = 40 * 1024 * 1024   # tile working-set budget (v7x physical VMEM = 64 MiB)
_VMEM_LIMIT = 48 * 1024 * 1024    # scoped-VMEM limit handed to Mosaic (v5e default is 16 MiB)

# Optional MXU feed dtype for the X @ Y^T cross term.  Set to jnp.bfloat16 on
# v6e/v7x for native MXU rate + half the input HBM traffic when the small
# cross-term precision loss is acceptable (row norms / accumulation stay f32).
_MATMUL_DTYPE = None


def _round_up(v, mult):
    return ((v + mult - 1) // mult) * mult


def _tile_vmem_bytes(tm, tn, tk, kfull, in_itemsize):
    """Rough double-buffered VMEM footprint of one grid step."""
    inputs = 2 * (tm + tn) * tk * in_itemsize        # X (tm,tk) + Y^T (tk,tn) tiles, 2 buffers
    out = 2 * tm * tn * 4                            # f32 output tile, 2 buffers
    norms = 2 * tm * 128 * 4 + 2 * 8 * tn * 4        # (tm,1)/(1,tn) blocks, (8,128)-padded
    acc = tm * tn * 4 if tk < kfull else 0           # f32 accumulator scratch (K-blocked path)
    return inputs + out + norms + acc


def _pick_tiles(n, m, d, in_itemsize):
    """Choose (tm, tn, tk, padded_d)."""
    dp = _round_up(d, 128)                 # feature dim is on lanes: pad to 128
    tm = n if n <= 512 else 512
    tn = m if m <= 512 else 512
    # v7x megacore: keep >= 2 parallel blocks for mid-sized problems so both
    # TensorCores get work.
    if n <= 512 and m <= 512:
        if n >= 256:
            tm = _round_up(pl.cdiv(n, 2), 8)
        elif m >= 256:
            tn = _round_up(pl.cdiv(m, 2), 128)
    # Feature (K) blocking keeps big MXU output tiles for any D within the
    # VMEM budget.
    tk = dp
    while _tile_vmem_bytes(tm, tn, tk, dp, in_itemsize) > _VMEM_BUDGET and tk > 512:
        tk = max(512, _round_up(pl.cdiv(tk, 2), 128))
    if tk < dp:
        dp = _round_up(d, tk)              # zero-pad so tk divides the feature dim exactly
    # Last resort (extreme D even after K-blocking): shrink the output tile.
    while _tile_vmem_bytes(tm, tn, tk, dp, in_itemsize) > _VMEM_BUDGET and max(tm, tn) > 128:
        if tm >= tn:
            tm = max(128, _round_up(pl.cdiv(tm, 2), 8))
        else:
            tn = max(128, _round_up(pl.cdiv(tn, 2), 128))
    return tm, tn, tk, dp


def _make_kernel(apply_exp, k_blocked):
    """dnorm2 / RBF kernel for one (tm, tn) output tile.

    xy = X @ Y^T runs on the MXU (f32 accumulate); xx/yy are HOISTED row norms
    fed as (tm,1)/(1,tn) inputs, so the per-step work is purely
    MXU + VPU combine + EUP exp + lane-dense store.
    """

    def _combine(xy, xx, yy, gamma_ref):
        # Clamp tiny negatives from cancellation so exp() never exceeds 1.
        d2 = jnp.maximum(xx - 2.0 * xy + yy, 0.0)
        if apply_exp:
            return jnp.exp(-gamma_ref[0, 0] * d2)
        return d2

    if not k_blocked:
        def kernel(gamma_ref, x_ref, yt_ref, xx_ref, yy_ref, o_ref):
            xy = jnp.dot(x_ref[...], yt_ref[...],
                         preferred_element_type=jnp.float32)
            o_ref[...] = _combine(xy, xx_ref[...], yy_ref[...], gamma_ref)
        return kernel

    def kernel(gamma_ref, x_ref, yt_ref, xx_ref, yy_ref, o_ref, acc_ref):
        k = pl.program_id(2)

        @pl.when(k == 0)
        def _():
            acc_ref[...] = jnp.zeros_like(acc_ref)

        acc_ref[...] += jnp.dot(x_ref[...], yt_ref[...],
                                preferred_element_type=jnp.float32)

        @pl.when(k == pl.num_programs(2) - 1)
        def _():
            o_ref[...] = _combine(acc_ref[...], xx_ref[...], yy_ref[...],
                                  gamma_ref)

    return kernel


def _rbf_pallas(x, y, gamma, apply_exp=True, matmul_dtype=_MATMUL_DTYPE):
    n, d = x.shape
    m, d2 = y.shape
    assert d == d2, "X and Y must share the feature dimension"

    # Hoisted row norms (exact f32), computed ONCE instead of per grid step.
    xf = x.astype(jnp.float32)
    yf = y.astype(jnp.float32)
    xx = jnp.sum(xf * xf, axis=1, keepdims=True)          # (N, 1)
    yy = jnp.sum(yf * yf, axis=1).reshape(1, m)           # (1, M)

    x_in = x if matmul_dtype is None else x.astype(matmul_dtype)
    y_in = y if matmul_dtype is None else y.astype(matmul_dtype)
    itemsize = jnp.dtype(x_in.dtype).itemsize

    tm, tn, tk, dp = _pick_tiles(n, m, d, itemsize)
    if dp != d:
        # Zero padding on the feature axis changes neither X@Y^T nor the norms.
        x_in = jnp.pad(x_in, ((0, 0), (0, dp - d)))
        y_in = jnp.pad(y_in, ((0, 0), (0, dp - d)))
    # One-time HBM transpose: Y^T is the canonical (K, N) MXU operand layout,
    # so the kernel never transposes a tile.
    y_t = y_in.T

    gamma_arr = jnp.asarray(gamma, jnp.float32).reshape(1, 1)
    grid_k = dp // tk
    grid_nm = (pl.cdiv(n, tm), pl.cdiv(m, tn))

    smem_spec = pl.BlockSpec(memory_space=pltpu.MemorySpace.SMEM)

    if grid_k == 1:
        kernel = _make_kernel(apply_exp, k_blocked=False)
        grid = grid_nm
        in_specs = [
            smem_spec,                                        # gamma scalar
            pl.BlockSpec((tm, tk), lambda i, j: (i, 0)),      # X tile
            pl.BlockSpec((tk, tn), lambda i, j: (0, j)),      # Y^T tile
            pl.BlockSpec((tm, 1), lambda i, j: (i, 0)),       # ||x||^2
            pl.BlockSpec((1, tn), lambda i, j: (0, j)),       # ||y||^2
        ]
        out_spec = pl.BlockSpec((tm, tn), lambda i, j: (i, j))
        scratch = []
        semantics = ("parallel", "parallel")
    else:
        kernel = _make_kernel(apply_exp, k_blocked=True)
        grid = grid_nm + (grid_k,)                            # reduction axis last
        in_specs = [
            smem_spec,
            pl.BlockSpec((tm, tk), lambda i, j, k: (i, k)),
            pl.BlockSpec((tk, tn), lambda i, j, k: (k, j)),
            pl.BlockSpec((tm, 1), lambda i, j, k: (i, 0)),
            pl.BlockSpec((1, tn), lambda i, j, k: (0, j)),
        ]
        out_spec = pl.BlockSpec((tm, tn), lambda i, j, k: (i, j))
        scratch = [pltpu.VMEM((tm, tn), jnp.float32)]
        semantics = ("parallel", "parallel", "arbitrary")

    return pl.pallas_call(
        kernel,
        out_shape=jax.ShapeDtypeStruct((n, m), jnp.float32),
        grid=grid,
        in_specs=in_specs,
        out_specs=out_spec,
        scratch_shapes=scratch,
        compiler_params=pltpu.CompilerParams(
            dimension_semantics=semantics,
            vmem_limit_bytes=_VMEM_LIMIT),
    )(gamma_arr, x_in, y_t, xx, yy)


def _exp_kernel(gamma_ref, d_ref, o_ref):
    o_ref[...] = jnp.exp(-gamma_ref[0, 0] * jnp.maximum(d_ref[...], 0.0))


def _rbf_apply(gamma, dnorm2):
    """K = exp(-gamma * dnorm2): HBM-bound, so large lane-dense tiles; the
    dnorm2 HBM buffer is aliased into K (saves one NxM f32 allocation)."""
    n, m = dnorm2.shape
    tm = n if n <= 1024 else 1024
    tn = m if m <= 1024 else 1024
    gamma_arr = jnp.asarray(gamma, jnp.float32).reshape(1, 1)
    return pl.pallas_call(
        _exp_kernel,
        out_shape=jax.ShapeDtypeStruct((n, m), jnp.float32),
        grid=(pl.cdiv(n, tm), pl.cdiv(m, tn)),
        in_specs=[
            pl.BlockSpec(memory_space=pltpu.MemorySpace.SMEM),
            pl.BlockSpec((tm, tn), lambda i, j: (i, j)),
        ],
        out_specs=pl.BlockSpec((tm, tn), lambda i, j: (i, j)),
        input_output_aliases={1: 0},
        compiler_params=pltpu.CompilerParams(
            dimension_semantics=("parallel", "parallel"),
            vmem_limit_bytes=_VMEM_LIMIT),
    )(gamma_arr, dnorm2)


def _median_gamma(dnorm2, n_particles):
    # Median-bandwidth heuristic.  The global median over N*M entries has no
    # clean Pallas equivalent, so it runs as plain-JAX glue.
    # TODO(synk): subsampled/approximate median for very large N*M.
    h = jnp.median(dnorm2) / (2.0 * jnp.log(jnp.float32(n_particles + 1)))
    sigma = jnp.sqrt(h)
    return 1.0 / (1e-8 + 2.0 * sigma ** 2)


@jax.jit
def _rbf_median_jit(x, y):
    n, d = x.shape
    m, _ = y.shape
    dnorm2 = _rbf_pallas(x, y, gamma=1.0, apply_exp=False)
    gamma = _median_gamma(dnorm2, n)
    # Second pass: recomputing from X/Y reads (N+M)*D floats vs N*M floats for
    # re-reading dnorm2 -- pick whichever is less HBM traffic.
    if (n + m) * _round_up(d, 128) < n * m:
        return _rbf_pallas(x, y, gamma=gamma, apply_exp=True)
    return _rbf_apply(gamma, dnorm2)


@jax.jit
def _rbf_gamma_jit(x, y, gamma):
    return _rbf_pallas(x, y, gamma=gamma, apply_exp=True)


def rbf_forward(x, y, sigma=None, gamma=None):
    """Matches RBF(sigma, gamma).forward(X, Y) semantics (returns f32 K_XY)."""
    if gamma is not None:
        return _rbf_gamma_jit(x, y, jnp.asarray(gamma, jnp.float32))
    if sigma is not None:
        s = jnp.asarray(sigma, jnp.float32)
        return _rbf_gamma_jit(x, y, 1.0 / (1e-8 + 2.0 * s ** 2))
    return _rbf_median_jit(x, y)


def _rbf_reference(x, y, sigma=None, gamma=None):
    """Pure-JAX reference of the PyTorch forward."""
    xx = x @ x.T
    xy = x @ y.T
    yy = y @ y.T
    dnorm2 = -2.0 * xy + jnp.diag(xx)[:, None] + jnp.diag(yy)[None, :]
    if sigma is None:
        h = jnp.median(dnorm2) / (2.0 * jnp.log(jnp.float32(x.shape[0] + 1)))
        sigma = jnp.sqrt(h)
    if gamma is None:
        gamma = 1.0 / (1e-8 + 2.0 * sigma ** 2)
    return jnp.exp(-gamma * dnorm2)


if __name__ == "__main__":
    # RBF has no learnable parameters; inputs are X (n_particles, dim), Y (m, dim).
    key = jax.random.PRNGKey(0)
    kx, ky = jax.random.split(key)
    N, M, D = 16, 8, 32
    X = jax.random.normal(kx, (N, D), dtype=jnp.float32)
    Y = jax.random.normal(ky, (M, D), dtype=jnp.float32)

    # Default module config: sigma=None, gamma=None (median-bandwidth path).
    K = jax.block_until_ready(rbf_forward(X, Y))
    assert K.shape == (N, M)
    assert jnp.allclose(K, _rbf_reference(X, Y), atol=1e-5, rtol=1e-5), "median-path mismatch"

    # Explicit-sigma / explicit-gamma configs exercise the fused single-pass kernel.
    K2 = jax.block_until_ready(rbf_forward(X, Y, sigma=1.5))
    assert jnp.allclose(K2, _rbf_reference(X, Y, sigma=1.5), atol=1e-5, rtol=1e-5), "sigma-path mismatch"

    K3 = jax.block_until_ready(rbf_forward(X, Y, gamma=0.25))
    assert jnp.allclose(K3, _rbf_reference(X, Y, gamma=0.25), atol=1e-5, rtol=1e-5), "gamma-path mismatch"

    print("KERNEL_OK")
</pallas_src>

<mosaic_0001>
module attributes {stable_mosaic.version = 11 : i64} {
  func.func @_exp_kernel(%arg0: i32, %arg1: i32, %arg2: memref<1x1xf32, #tpu.memory_space<smem>>, %arg3: memref<16x8xf32, #tpu.memory_space<vmem>>, %arg4: memref<16x8xf32, #tpu.memory_space<vmem>>) attributes {dimension_semantics = [#tpu.dimension_semantics<parallel>, #tpu.dimension_semantics<parallel>], iteration_bounds = array<i64: 1, 1>, scalar_prefetch = 0 : i64, scratch_operands = 0 : i64, tpu.core_type = #tpu.core_type<tc>, window_params = [{transform_indices = @transform_0, window_bounds = array<i64: 1, 1>}, {transform_indices = @transform_1, window_bounds = array<i64: 16, 8>}, {transform_indices = @transform_2, window_bounds = array<i64: 16, 8>}]} {
    %c0 = arith.constant 0 : index
    %c0_0 = arith.constant 0 : index
    %0 = memref.load %arg2[%c0, %c0_0] : memref<1x1xf32, #tpu.memory_space<smem>>
    %cst = arith.constant 0.000000e+00 : f32
    %1 = arith.subf %cst, %0 : f32
    %c0_1 = arith.constant 0 : index
    %c0_2 = arith.constant 0 : index
    %2 = vector.load %arg3[%c0_1, %c0_2] : memref<16x8xf32, #tpu.memory_space<vmem>>, vector<16x8xf32>
    %cst_3 = arith.constant 0.000000e+00 : f32
    %3 = vector.broadcast %cst_3 : f32 to vector<16x8xf32>
    %4 = arith.maximumf %2, %3 : vector<16x8xf32>
    %5 = vector.broadcast %1 : f32 to vector<16x8xf32>
    %6 = arith.mulf %5, %4 : vector<16x8xf32>
    %7 = math.exp %6 : vector<16x8xf32>
    %c0_4 = arith.constant 0 : index
    %c0_5 = arith.constant 0 : index
    %8 = vector.load %arg4[%c0_4, %c0_5] : memref<16x8xf32, #tpu.memory_space<vmem>>, vector<16x8xf32>
    tpu.vector_store %arg4[%c0_4, %c0_5], %7 {strides = array<i32>} : memref<16x8xf32, #tpu.memory_space<vmem>>, vector<16x8xf32>,
    return
  }
  func.func @transform_0(%arg0: i32, %arg1: i32) -> (i32, i32) {
    %c0_i32 = arith.constant 0 : i32
    %c0_i32_0 = arith.constant 0 : i32
    %c0_i32_1 = arith.constant 0 : i32
    return %c0_i32, %c0_i32_0 : i32, i32
  }
  func.func @transform_1(%arg0: i32, %arg1: i32) -> (i32, i32) {
    %c0_i32 = arith.constant 0 : i32
    return %arg0, %arg1 : i32, i32
  }
  func.func @transform_2(%arg0: i32, %arg1: i32) -> (i32, i32) {
    %c0_i32 = arith.constant 0 : i32
    return %arg0, %arg1 : i32, i32
  }
}

module attributes {stable_mosaic.version = 11 : i64} {
  func.func @kernel(%arg0: i32, %arg1: i32, %arg2: memref<1x1xf32, #tpu.memory_space<smem>>, %arg3: memref<16x128xf32, #tpu.memory_space<vmem>>, %arg4: memref<128x8xf32, #tpu.memory_space<vmem>>, %arg5: memref<16x1xf32, #tpu.memory_space<vmem>>, %arg6: memref<1x8xf32, #tpu.memory_space<vmem>>, %arg7: memref<16x8xf32, #tpu.memory_space<vmem>>) attributes {dimension_semantics = [#tpu.dimension_semantics<parallel>, #tpu.dimension_semantics<parallel>], iteration_bounds = array<i64: 1, 1>, scalar_prefetch = 0 : i64, scratch_operands = 0 : i64, tpu.core_type = #tpu.core_type<tc>, window_params = [{transform_indices = @transform_0, window_bounds = array<i64: 1, 1>}, {transform_indices = @transform_1, window_bounds = array<i64: 16, 128>}, {transform_indices = @transform_2, window_bounds = array<i64: 128, 8>}, {transform_indices = @transform_3, window_bounds = array<i64: 16, 1>}, {transform_indices = @transform_4, window_bounds = array<i64: 1, 8>}, {transform_indices = @transform_5, window_bounds = array<i64: 16, 8>}]} {
    %c0 = arith.constant 0 : index
    %c0_0 = arith.constant 0 : index
    %0 = vector.load %arg3[%c0, %c0_0] : memref<16x128xf32, #tpu.memory_space<vmem>>, vector<16x128xf32>
    %c0_1 = arith.constant 0 : index
    %c0_2 = arith.constant 0 : index
    %1 = vector.load %arg4[%c0_1, %c0_2] : memref<128x8xf32, #tpu.memory_space<vmem>>, vector<128x8xf32>
    %cst = arith.constant dense<0.000000e+00> : vector<16x8xf32>
    %2 = tpu.matmul %0, %1, %cst {dimension_numbers = #tpu.dot_dimension_numbers<[1], [0], [0], [1], [0, 0, 1, 1], [], []>} : vector<16x128xf32>, vector<128x8xf32>, vector<16x8xf32> -> vector<16x8xf32>
    %c0_3 = arith.constant 0 : index
    %c0_4 = arith.constant 0 : index
    %3 = vector.load %arg5[%c0_3, %c0_4] : memref<16x1xf32, #tpu.memory_space<vmem>>, vector<16x1xf32>
    %c0_5 = arith.constant 0 : index
    %c0_6 = arith.constant 0 : index
    %4 = vector.load %arg6[%c0_5, %c0_6] : memref<1x8xf32, #tpu.memory_space<vmem>>, vector<1x8xf32>
    %cst_7 = arith.constant 2.000000e+00 : f32
    %5 = vector.broadcast %cst_7 : f32 to vector<16x8xf32>
    %6 = arith.mulf %5, %2 : vector<16x8xf32>
    %7 = vector.broadcast %3 : vector<16x1xf32> to vector<16x8xf32>
    %8 = arith.subf %7, %6 : vector<16x8xf32>
    %9 = vector.broadcast %4 : vector<1x8xf32> to vector<16x8xf32>
    %10 = arith.addf %8, %9 : vector<16x8xf32>
    %cst_8 = arith.constant 0.000000e+00 : f32
    %11 = vector.broadcast %cst_8 : f32 to vector<16x8xf32>
    %12 = arith.maximumf %10, %11 : vector<16x8xf32>
    %c0_9 = arith.constant 0 : index
    %c0_10 = arith.constant 0 : index
    %13 = vector.load %arg7[%c0_9, %c0_10] : memref<16x8xf32, #tpu.memory_space<vmem>>, vector<16x8xf32>
    tpu.vector_store %arg7[%c0_9, %c0_10], %12 {strides = array<i32>} : memref<16x8xf32, #tpu.memory_space<vmem>>, vector<16x8xf32>,
    return
  }
  func.func @transform_0(%arg0: i32, %arg1: i32) -> (i32, i32) {
    %c0_i32 = arith.constant 0 : i32
    %c0_i32_0 = arith.constant 0 : i32
    %c0_i32_1 = arith.constant 0 : i32
    return %c0_i32, %c0_i32_0 : i32, i32
  }
  func.func @transform_1(%arg0: i32, %arg1: i32) -> (i32, i32) {
    %c0_i32 = arith.constant 0 : i32
    %c0_i32_0 = arith.constant 0 : i32
    return %arg0, %c0_i32 : i32, i32
  }
  func.func @transform_2(%arg0: i32, %arg1: i32) -> (i32, i32) {
    %c0_i32 = arith.constant 0 : i32
    %c0_i32_0 = arith.constant 0 : i32
    return %c0_i32, %arg1 : i32, i32
  }
  func.func @transform_3(%arg0: i32, %arg1: i32) -> (i32, i32) {
    %c0_i32 = arith.constant 0 : i32
    %c0_i32_0 = arith.constant 0 : i32
    return %arg0, %c0_i32 : i32, i32
  }
  func.func @transform_4(%arg0: i32, %arg1: i32) -> (i32, i32) {
    %c0_i32 = arith.constant 0 : i32
    %c0_i32_0 = arith.constant 0 : i32
    return %c0_i32, %arg1 : i32, i32
  }
  func.func @transform_5(%arg0: i32, %arg1: i32) -> (i32, i32) {
    %c0_i32 = arith.constant 0 : i32
    return %arg0, %arg1 : i32, i32
  }
}

</mosaic_0001>

<llo_original>
// kernel: _rbf_median_jit.3
$region0: #{_rbf_median_jit.3}
  #allocation0 [shape = 'u32[]', space=smem, size = 0x4, offset = 0x4, fixed_abs, tag = 'smem constant byte address 0x4 - core index']
  #allocation1 [shape = 'u32[144,128]{1,0:T(1,128)}', space=vmem, size = 0x12000, scoped, tag = 'internal scratch']
  #allocation2 [shape = 'f32[1,1]{1,0:T(1,128)S(6)}', space=smem, size = 0x200, scoped, tag = 'scoped memory for _rbf_median_jit.3']
  %s0 = inlined_call_operand.<no memory space> [shape: f32[1,1], index: 0, kind: input, shape index: {}]
  %s1 = inlined_call_operand.vmem [shape: f32[16,8], index: 1, kind: input, shape index: {}, may-alias: {1,2}]
  %s2 = inlined_call_operand.vmem [shape: f32[16,8], index: 2, kind: output, shape index: {}, may-alias: {1,2}]
  %s3 = sld [smem:[#allocation0]]
  $region18: #{_rbf_median_jit.3} parent=0
    _
  %s5 = ssub.s32 1, %s3
  %s6 = scalar_select 0, %s5, %s3
  %7 = sst [smem:[#allocation2]] %s0
  // Predicated region
  $region2: #{_rbf_median_jit.3} parent=0 // pred_check
    _
  $region3: #{_rbf_median_jit.3} parent=0 // pred_check_branch
    %9 = sbr.rel (0) target = $region5
  $region4: #{_rbf_median_jit.3} parent=0 // pred_region
    _
  $region5: #{_rbf_median_jit.3} parent=0 // pred_fallthru
    _
  // Predicated region
  $region6: #{_rbf_median_jit.3} parent=0 // pred_check
    _
  $region7: #{_rbf_median_jit.3} parent=0 // pred_check_branch
    %11 = sbr.rel (0) target = $region9
  $region8: #{_rbf_median_jit.3} parent=0 // pred_region
    _
  $region9: #{_rbf_median_jit.3} parent=0 // pred_fallthru
    _
  %s12 = sld [smem:[#allocation2]]
  %s13 = ssub.f32 0.0, %s12
  %v14 = vld [vmem:[%s1] sm:$0xff]
  %v15 = vld [vmem:[%s1 + $0x8] sm:$0xff]
  %v16 = vmax.f32 %v14, 0.0
  %v17 = vmax.f32 %v15, 0.0
  %v18 = vstv %s13
  %v19 = vmul.f32 %v18, %v16
  %v20 = vmul.f32 %v18, %v17
  %v21 = vmul.f32 %v19, 1.442695
  %v22 = vpow.pop %v21
  %v23 = vmul.f32 %v20, 1.442695
  %v24 = vpow.pop %v23
  %vm25 = vcmask 64512
  %26 = vst.msk [vmem:[%s2] sm:$0xff] %vm25, %v22
  %27 = vst.msk [vmem:[%s2 + $0x8] sm:$0xff] %vm25, %v24
  // Predicated region
  $region10: #{_rbf_median_jit.3} parent=0 // pred_check
    _
  $region11: #{_rbf_median_jit.3} parent=0 // pred_check_branch
    %29 = sbr.rel (0) target = $region13
  $region12: #{_rbf_median_jit.3} parent=0 // pred_region
    _
  $region13: #{_rbf_median_jit.3} parent=0 // pred_fallthru
    _
  // Predicated region
  $region14: #{_rbf_median_jit.3} parent=0 // pred_check
    _
  $region15: #{_rbf_median_jit.3} parent=0 // pred_check_branch
    %31 = sbr.rel (0) target = $region17
  $region16: #{_rbf_median_jit.3} parent=0 // pred_region
    _
  $region17: #{_rbf_median_jit.3} parent=0 // pred_fallthru
    _

// kernel: _rbf_median_jit.2
$region0: #{_rbf_median_jit.2}
  #allocation0 [shape = 'u32[]', space=smem, size = 0x4, offset = 0x4, fixed_abs, tag = 'smem constant byte address 0x4 - core index']
  #allocation1 [shape = 'u32[144,128]{1,0:T(1,128)}', space=vmem, size = 0x12000, scoped, tag = 'internal scratch']
  #allocation2 [shape = 'f32[1,1]{1,0:T(1,128)S(6)}', space=smem, size = 0x200, scoped, tag = 'scoped memory for _rbf_median_jit.2']
  %s0 = inlined_call_operand.<no memory space> [shape: f32[1,1], index: 0, kind: input, shape index: {}]
  %s1 = inlined_call_operand.vmem [shape: f32[16,128], index: 1, kind: input, shape index: {}]
  %s2 = inlined_call_operand.vmem [shape: f32[128,8], index: 2, kind: input, shape index: {}]
  %s3 = inlined_call_operand.vmem [shape: f32[16,1], index: 3, kind: input, shape index: {}]
  %s4 = inlined_call_operand.vmem [shape: f32[1,8], index: 4, kind: input, shape index: {}]
  %s5 = inlined_call_operand.vmem [shape: f32[16,8], index: 5, kind: output, shape index: {}]
  %s6 = sld [smem:[#allocation0]]
  $region30: #{_rbf_median_jit.2} parent=0
    _
  %s8 = ssub.s32 1, %s6
  %s9 = scalar_select 0, %s8, %s6
  %10 = sst [smem:[#allocation2]] %s0
  // Predicated region
  $region2: #{_rbf_median_jit.2} parent=0 // pred_check
    _
  $region3: #{_rbf_median_jit.2} parent=0 // pred_check_branch
    %12 = sbr.rel (0) target = $region5
  $region4: #{_rbf_median_jit.2} parent=0 // pred_region
    _
  $region5: #{_rbf_median_jit.2} parent=0 // pred_fallthru
    _
  // Predicated region
  $region6: #{_rbf_median_jit.2} parent=0 // pred_check
    _
  $region7: #{_rbf_median_jit.2} parent=0 // pred_check_branch
    %14 = sbr.rel (0) target = $region9
  $region8: #{_rbf_median_jit.2} parent=0 // pred_region
    _
  $region9: #{_rbf_median_jit.2} parent=0 // pred_fallthru
    _
  // Predicated region
  $region10: #{_rbf_median_jit.2} parent=0 // pred_check
    _
  $region11: #{_rbf_median_jit.2} parent=0 // pred_check_branch
    %16 = sbr.rel (0) target = $region13
  $region12: #{_rbf_median_jit.2} parent=0 // pred_region
    _
  $region13: #{_rbf_median_jit.2} parent=0 // pred_fallthru
    _
  // Predicated region
  $region14: #{_rbf_median_jit.2} parent=0 // pred_check
    _
  $region15: #{_rbf_median_jit.2} parent=0 // pred_check_branch
    %18 = sbr.rel (0) target = $region17
  $region16: #{_rbf_median_jit.2} parent=0 // pred_region
    _
  $region17: #{_rbf_median_jit.2} parent=0 // pred_fallthru
    _
  // Predicated region
  $region18: #{_rbf_median_jit.2} parent=0 // pred_check
    _
  $region19: #{_rbf_median_jit.2} parent=0 // pred_check_branch
    %20 = sbr.rel (0) target = $region21
  $region20: #{_rbf_median_jit.2} parent=0 // pred_region
    _
  $region21: #{_rbf_median_jit.2} parent=0 // pred_fallthru
    _
  %v21 = vld [vmem:[%s1] sm:$0xff]
  %v22 = vld [vmem:[%s1 + $0x8] sm:$0xff]
  %v23 = vld [vmem:[%s2] sm:$0xff]
  %v24 = vld [vmem:[%s2 + $0x8] sm:$0xff]
  %v25 = vld [vmem:[%s2 + $0x10] sm:$0xff]
  %v26 = vld [vmem:[%s2 + $0x18] sm:$0xff]
  %v27 = vld [vmem:[%s2 + $0x20] sm:$0xff]
  %v28 = vld [vmem:[%s2 + $0x28] sm:$0xff]
  %v29 = vld [vmem:[%s2 + $0x30] sm:$0xff]
  %v30 = vld [vmem:[%s2 + $0x38] sm:$0xff]
  %v31 = vld [vmem:[%s2 + $0x40] sm:$0xff]
  %v32 = vld [vmem:[%s2 + $0x48] sm:$0xff]
  %v33 = vld [vmem:[%s2 + $0x50] sm:$0xff]
  %v34 = vld [vmem:[%s2 + $0x58] sm:$0xff]
  %v35 = vld [vmem:[%s2 + $0x60] sm:$0xff]
  %v36 = vld [vmem:[%s2 + $0x68] sm:$0xff]
  %v37 = vld [vmem:[%s2 + $0x70] sm:$0xff]
  %v38 = vld [vmem:[%s2 + $0x78] sm:$0xff]
  %39 = vmatprep.subr.mxu0 0.0
  %40 = vmatpush1.msra.mxu0 %v38
  %41 = vmatprep.subr.mxu0 0.0
  %42 = vmatpush1.msra.mxu0 %v37
  %43 = vmatprep.subr.mxu0 0.0
  %44 = vmatpush1.msra.mxu0 %v36
  %45 = vmatprep.subr.mxu0 0.0
  %46 = vmatpush1.msra.mxu0 %v35
  %47 = vmatprep.subr.mxu0 0.0
  %48 = vmatpush1.msra.mxu0 %v34
  %49 = vmatprep.subr.mxu0 0.0
  %50 = vmatpush1.msra.mxu0 %v33
  %51 = vmatprep.subr.mxu0 0.0
  %52 = vmatpush1.msra.mxu0 %v32
  %53 = vmatprep.subr.mxu0 0.0
  %54 = vmatpush1.msra.mxu0 %v31
  %55 = vmatprep.subr.mxu0 0.0
  %56 = vmatpush1.msra.mxu0 %v30
  %57 = vmatprep.subr.mxu0 0.0
  %58 = vmatpush1.msra.mxu0 %v29
  %59 = vmatprep.subr.mxu0 0.0
  %60 = vmatpush1.msra.mxu0 %v28
  %61 = vmatprep.subr.mxu0 0.0
  %62 = vmatpush1.msra.mxu0 %v27
  %63 = vmatprep.subr.mxu0 0.0
  %64 = vmatpush1.msra.mxu0 %v26
  %65 = vmatprep.subr.mxu0 0.0
  %66 = vmatpush1.msra.mxu0 %v25
  %67 = vmatprep.subr.mxu0 0.0
  %68 = vmatpush1.msra.mxu0 %v24
  %69 = vmatprep.subr.mxu0 0.0
  %70 = vmatpush1.msra.mxu0 %v23
  %71 = vmatprep.subr.mxu0 0.0
  %72 = vmatpush2.msra.mxu0 0.0
  %73 = vmatprep.subr.mxu0 0.0
  %74 = vmatpush2.msra.mxu0 0.0
  %75 = vmatprep.subr.mxu0 0.0
  %76 = vmatpush2.msra.mxu0 0.0
  %77 = vmatprep.subr.mxu0 0.0
  %78 = vmatpush2.msra.mxu0 0.0
  %79 = vmatprep.subr.mxu0 0.0
  %80 = vmatpush2.msra.mxu0 0.0
  %81 = vmatprep.subr.mxu0 0.0
  %82 = vmatpush2.msra.mxu0 0.0
  %83 = vmatprep.subr.mxu0 0.0
  %84 = vmatpush2.msra.mxu0 0.0
  %85 = vmatprep.subr.mxu0 0.0
  %86 = vmatpush2.msra.mxu0 0.0
  %87 = vmatprep.subr.mxu0 0.0
  %88 = vmatpush2.msra.mxu0 0.0
  %89 = vmatprep.subr.mxu0 0.0
  %90 = vmatpush2.msra.mxu0 0.0
  %91 = vmatprep.subr.mxu0 0.0
  %92 = vmatpush2.msra.mxu0 0.0
  %93 = vmatprep.subr.mxu0 0.0
  %94 = vmatpush2.msra.mxu0 0.0
  %95 = vmatprep.subr.mxu0 0.0
  %96 = vmatpush2.msra.mxu0 0.0
  %97 = vmatprep.subr.mxu0 0.0
  %98 = vmatpush2.msra.mxu0 0.0
  %99 = vmatprep.subr.mxu0 0.0
  %100 = vmatpush2.msra.mxu0 0.0
  %101 = vmatprep.subr.mxu0 0.0
  %102 = vmatpush2.msra.mxu0 0.0
  %103 = vmatprep.mubr.f32.mxu0 0.0
  %104 = vmatmul.mubr.f32.gmra.mxu0 %v21
  %v105 = vpop.f32.mrf.mxu0
  %v106 = vadd.f32 0.0, %v105
  %v107 = vpop.f32.mrf.mxu0
  %108 = vmatprep.mubr.f32.mxu0 0.0
  %109 = vmatmul.mubr.f32.gmra.mxu0 %v22
  %v110 = vpop.f32.mrf.mxu0
  %v111 = vadd.f32 0.0, %v110
  %v112 = vpop.f32.mrf.mxu0
  %113 = vdwg.mxu0
  %v114 = vld [vmem:[%s3] sm:$0xff]
  %v115 = vld [vmem:[%s3 + $0x8] sm:$0xff]
  %v116 = vld [vmem:[%s4] sm:$0x1]
  %v117 = vmul.f32 %v106, 2.0
  %v118 = vmul.f32 %v111, 2.0
  %120 = vset.pattern.permute.xlu0 0
  %121 = vperm.xlu0 %120, %v114
  %v122 = vpop.permute.xlu0 %121
  %125 = vset.pattern.permute.xlu0 0
  %126 = vperm.xlu0 %125, %v115
  %v127 = vpop.permute.xlu0 %126
  %v129 = vsub.f32 %v122, %v117
  %v130 = vsub.f32 %v127, %v118
  %v132 = vlaneseq
  %v133 = vshrl.u32 %v132, 7
  %v134 = vsub.s32 0, %v133
  %v135 = vrot.slane %v116, %v134
  %v137 = vadd.f32 %v129, %v135
  %v138 = vadd.f32 %v130, %v135
  %v139 = vmax.f32 %v137, 0.0
  %v140 = vmax.f32 %v138, 0.0
  %vm141 = vcmask 64512
  %142 = vst.msk [vmem:[%s5] sm:$0xff] %vm141, %v139
  %143 = vst.msk [vmem:[%s5 + $0x8] sm:$0xff] %vm141, %v140
  // Predicated region
  $region22: #{_rbf_median_jit.2} parent=0 // pred_check
    _
  $region23: #{_rbf_median_jit.2} parent=0 // pred_check_branch
    %145 = sbr.rel (0) target = $region25
  $region24: #{_rbf_median_jit.2} parent=0 // pred_region
    _
  $region25: #{_rbf_median_jit.2} parent=0 // pred_fallthru
    _
  // Predicated region
  $region26: #{_rbf_median_jit.2} parent=0 // pred_check
    _
  $region27: #{_rbf_median_jit.2} parent=0 // pred_check_branch
    %147 = sbr.rel (0) target = $region29
  $region28: #{_rbf_median_jit.2} parent=0 // pred_region
    _
  $region29: #{_rbf_median_jit.2} parent=0 // pred_fallthru
    _

</llo_original>
